<compile_context>
chip_gen: v5e
topology: v5e:2x2
jax: 0.10.0
libtpu: 0.0.40
codegen_flags: <defaults>
</compile_context>

<pallas_src>
import functools
import math

import numpy as np
import jax
import jax.numpy as jnp
from jax.experimental import pallas as pl
from jax.experimental.pallas import tpu as pltpu


def _lane_fold(prod, tL):
    """Fold a (tN, tC, tL) f32 tile into (tN, tC, 128) with lane-aligned VPU adds."""
    acc = prod[..., 0:128]
    for k in range(1, tL // 128):
        acc = acc + prod[..., k * 128:(k + 1) * 128]
    return acc


def _dct_kernel(x_ref, w_ref, o_ref, *scratch, L, tL, nL):
    """One (batch-tile, channel-tile, length-tile) grid step of y = sum_l x * W."""
    prod = x_ref[...].astype(jnp.float32) * w_ref[...].astype(jnp.float32)[None, :, :]

    if nL == 1:
        # Whole length axis in one tile: no cross-step state; reduce and store.
        o_ref[...] = jnp.sum(prod, axis=-1).astype(o_ref.dtype)
        return

    acc_ref = scratch[0]                       # (tN, tC, 128) f32 lane-wide accumulator
    l = pl.program_id(2)
    last = nL - 1

    @pl.when(l == 0)
    def _init():
        acc_ref[...] = jnp.zeros_like(acc_ref)

    if L % tL != 0:
        # Mask only the ragged last tile: its x/W block has garbage lanes past L.
        # Mask the *product* (select does not propagate NaN/Inf from the
        # unselected branch), never the weight alone.
        @pl.when(l != last)
        def _acc_full():
            acc_ref[...] += _lane_fold(prod, tL)

        @pl.when(l == last)
        def _acc_masked():
            lane = jax.lax.broadcasted_iota(jnp.int32, (1, 1, tL), 2)
            valid = lane < (L - l * tL)
            acc_ref[...] += _lane_fold(jnp.where(valid, prod, 0.0), tL)
    else:
        acc_ref[...] += _lane_fold(prod, tL)

    @pl.when(l == last)
    def _finalize():
        # Single cross-lane (XLU) reduce per (batch, channel) tile.
        o_ref[...] = jnp.sum(acc_ref[...], axis=-1).astype(o_ref.dtype)


def _choose_tiles(N, C, L, x_itemsize, w_itemsize, lane_tile, budget):
    """Pick (tN, tC, tL) against a VMEM budget (double-buffered blocks + scratch)."""
    # Channel tile: the (N, C) output block needs tC % 128 == 0 or tC == C.
    tC = 128 if (C > 128 and C % 128 == 0) else C
    # Length tile: whole axis when it fits one tile, else a 128-multiple tile.
    tL = L if L <= lane_tile else lane_tile

    def cost(tn, tl):
        x_blk = tn * tC * tl * x_itemsize
        w_blk = tC * tl * w_itemsize
        acc = tn * tC * 128 * 4
        out = tn * tC * 4
        return 2 * (x_blk + w_blk) + acc + 2 * out

    tN = N
    if cost(tN, tL) > budget:
        if N > 8:
            # Largest batch tile (multiple of 8 for the output block) that fits.
            per_n = 2 * tC * tL * x_itemsize + tC * 128 * 4 + 2 * tC * 4
            fixed = 2 * tC * tL * w_itemsize
            fit = max(0, budget - fixed) // per_n
            tN = min(N, max(8, (fit // 8) * 8))
        # If even the smallest batch tile is too big, shrink the length tile
        # (keeping it a multiple of 128 so lane-aligned folding stays valid).
        while cost(tN, tL) > budget and tL > 128:
            tL = max(128, ((tL // 2) // 128) * 128)

    # v7x has 2 TensorCores: make sure at least one *parallel* axis has >= 2
    # blocks when possible (no-op on single-TC v5e/v6e).
    nC = C // tC
    nN = -(-N // tN)
    if nC == 1 and nN == 1 and N >= 16:
        half_up8 = ((((N + 1) // 2) + 7) // 8) * 8
        if half_up8 < N:
            tN = half_up8
    return tN, tC, tL


def multi_spectral_dct(x, weight, *, lane_tile=2048,
                       vmem_budget_bytes=20 * 1024 * 1024):
    """y[n, c] = sum_l x[n, c, l] * weight[c, l].

    x: (N, C, L), weight: (C, L).  Pass x (and weight) as bf16 for large inputs:
    the kernel is HBM-read bound and upcasts to f32 for accumulation in-kernel.
    """
    N, C, L = x.shape
    assert weight.shape == (C, L), (weight.shape, (C, L))
    lane_tile = max(128, (lane_tile // 128) * 128)

    tN, tC, tL = _choose_tiles(N, C, L,
                               jnp.dtype(x.dtype).itemsize,
                               jnp.dtype(weight.dtype).itemsize,
                               lane_tile, vmem_budget_bytes)
    nN, nC, nL = pl.cdiv(N, tN), C // tC, pl.cdiv(L, tL)
    assert nL == 1 or tL % 128 == 0, (tL, L)

    out_dtype = jnp.promote_types(x.dtype, weight.dtype)
    kernel = functools.partial(_dct_kernel, L=L, tL=tL, nL=nL)
    # Lane-wide accumulator only needed when the reduction spans grid steps.
    scratch = [pltpu.VMEM((tN, tC, 128), jnp.float32)] if nL > 1 else []

    return pl.pallas_call(
        kernel,
        out_shape=jax.ShapeDtypeStruct((N, C), out_dtype),
        grid_spec=pltpu.PrefetchScalarGridSpec(
            num_scalar_prefetch=0,
            grid=(nN, nC, nL),
            in_specs=[
                pl.BlockSpec((tN, tC, tL), lambda n, c, l: (n, c, l)),
                pl.BlockSpec((tC, tL), lambda n, c, l: (c, l)),
            ],
            out_specs=pl.BlockSpec((tN, tC), lambda n, c, l: (n, c)),
            scratch_shapes=scratch,
        ),
        compiler_params=pltpu.CompilerParams(
            dimension_semantics=("parallel", "parallel", "arbitrary"),
            vmem_limit_bytes=32 * 1024 * 1024,
        ),
    )(x, weight)


def build_dct_filter(length, mapper_x, channel):
    """Same construction as MultiSpectralDCTLayer.get_dct_filter (host-side)."""
    assert channel % len(mapper_x) == 0
    c_part = channel // len(mapper_x)
    f = np.zeros((channel, length), dtype=np.float64)
    t = np.arange(length, dtype=np.float64)
    for i, u in enumerate(mapper_x):
        v = np.cos(np.pi * u * (t + 0.5) / length) / math.sqrt(length)
        if u != 0:
            v = v * math.sqrt(2)
        f[i * c_part:(i + 1) * c_part, :] = v
    return jnp.asarray(f, jnp.float32)


if __name__ == "__main__":
    key = jax.random.PRNGKey(0)
    k1, k2, k3 = jax.random.split(key, 3)

    def reference(x, w):
        return jnp.sum(x.astype(jnp.float32) * w.astype(jnp.float32)[None, :, :],
                       axis=2)

    # --- Test 1: module-sized f32 input; single-step reduction path ----------
    batch, channel, length = 2, 64, 1000
    mapper_x = [0, 1, 2, 3, 4, 5, 6, 7]          # 8 frequencies, 64 % 8 == 0
    w1 = build_dct_filter(length, mapper_x, channel)
    x1 = jax.random.normal(k1, (batch, channel, length), jnp.float32)
    out1 = jax.block_until_ready(jax.jit(lambda a: multi_spectral_dct(a, w1))(x1))
    assert out1.shape == (batch, channel), out1.shape
    assert bool(jnp.allclose(out1, reference(x1, w1), atol=1e-4, rtol=1e-4)), "test1"

    # --- Test 2: bf16 x, multi-tile reduction with ragged last length tile,
    #             channel tiling (nC=2) and a ragged batch tile (nN=2) ---------
    N2, C2, L2 = 12, 256, 640
    w2 = build_dct_filter(L2, list(range(8)), C2)
    x2 = jax.random.normal(k2, (N2, C2, L2), jnp.float32).astype(jnp.bfloat16)
    fn2 = jax.jit(lambda a: multi_spectral_dct(a, w2, lane_tile=256,
                                               vmem_budget_bytes=2_500_000))
    out2 = jax.block_until_ready(fn2(x2))
    assert out2.shape == (N2, C2), out2.shape
    assert out2.dtype == jnp.float32, out2.dtype
    assert bool(jnp.allclose(out2, reference(x2, w2), atol=2e-2, rtol=2e-2)), "test2"

    # --- Test 3: nC == 1 forces the batch (parallel) axis to split into 2 -----
    N3, C3, L3 = 32, 64, 256
    w3 = build_dct_filter(L3, list(range(8)), C3)
    x3 = jax.random.normal(k3, (N3, C3, L3), jnp.float32)
    out3 = jax.block_until_ready(jax.jit(lambda a: multi_spectral_dct(a, w3))(x3))
    assert bool(jnp.allclose(out3, reference(x3, w3), atol=1e-4, rtol=1e-4)), "test3"

    print("KERNEL_OK")
</pallas_src>

<mosaic_0001>
module attributes {stable_mosaic.version = 11 : i64} {
  func.func @_dct_kernel(%arg0: i32, %arg1: i32, %arg2: i32, %arg3: memref<2x64x1000xf32, #tpu.memory_space<vmem>>, %arg4: memref<64x1000xf32, #tpu.memory_space<vmem>>, %arg5: memref<2x64xf32, #tpu.memory_space<vmem>>) attributes {dimension_semantics = [#tpu.dimension_semantics<parallel>, #tpu.dimension_semantics<parallel>, #tpu.dimension_semantics<arbitrary>], iteration_bounds = array<i64: 1, 1, 1>, scalar_prefetch = 0 : i64, scratch_operands = 0 : i64, tpu.core_type = #tpu.core_type<tc>, window_params = [{transform_indices = @transform_0, window_bounds = array<i64: 2, 64, 1000>}, {transform_indices = @transform_1, window_bounds = array<i64: 64, 1000>}, {transform_indices = @transform_2, window_bounds = array<i64: 2, 64>}]} {
    %c0 = arith.constant 0 : index
    %c0_0 = arith.constant 0 : index
    %c0_1 = arith.constant 0 : index
    %0 = vector.load %arg3[%c0, %c0_0, %c0_1] : memref<2x64x1000xf32, #tpu.memory_space<vmem>>, vector<2x64x1000xf32>
    %c0_2 = arith.constant 0 : index
    %c0_3 = arith.constant 0 : index
    %1 = vector.load %arg4[%c0_2, %c0_3] : memref<64x1000xf32, #tpu.memory_space<vmem>>, vector<64x1000xf32>
    %2 = vector.shape_cast %1 : vector<64x1000xf32> to vector<1x64x1000xf32>
    %3 = vector.broadcast %2 : vector<1x64x1000xf32> to vector<2x64x1000xf32>
    %4 = arith.mulf %0, %3 : vector<2x64x1000xf32>
    %cst = arith.constant dense<0.000000e+00> : vector<2x64xf32>
    %5 = vector.multi_reduction <add>, %4, %cst [2] : vector<2x64x1000xf32> to vector<2x64xf32>
    %c0_4 = arith.constant 0 : index
    %c0_5 = arith.constant 0 : index
    %6 = vector.load %arg5[%c0_4, %c0_5] : memref<2x64xf32, #tpu.memory_space<vmem>>, vector<2x64xf32>
    tpu.vector_store %arg5[%c0_4, %c0_5], %5 {strides = array<i32>} : memref<2x64xf32, #tpu.memory_space<vmem>>, vector<2x64xf32>,
    return
  }
  func.func @transform_0(%arg0: i32, %arg1: i32, %arg2: i32) -> (i32, i32, i32) {
    %c0_i32 = arith.constant 0 : i32
    return %arg0, %arg1, %arg2 : i32, i32, i32
  }
  func.func @transform_1(%arg0: i32, %arg1: i32, %arg2: i32) -> (i32, i32) {
    %c0_i32 = arith.constant 0 : i32
    return %arg1, %arg2 : i32, i32
  }
  func.func @transform_2(%arg0: i32, %arg1: i32, %arg2: i32) -> (i32, i32) {
    %c0_i32 = arith.constant 0 : i32
    return %arg0, %arg1 : i32, i32
  }
}

</mosaic_0001>

<llo_original>
// kernel: _lambda_.1
$region0: #{_lambda_.1}
  #allocation0 [shape = 'u32[]', space=smem, size = 0x4, offset = 0x4, fixed_abs, tag = 'smem constant byte address 0x4 - core index']
  #allocation1 [shape = 'u32[72,128]{1,0:T(1,128)}', space=vmem, size = 0x9000, scoped, tag = 'internal scratch']
  %s0 = inlined_call_operand.hbm [shape: f32[2,64,1000], index: 0, kind: input, shape index: {}]
  %s1 = inlined_call_operand.hbm [shape: f32[64,1000], index: 1, kind: input, shape index: {}]
  %s2 = inlined_call_operand.hbm [shape: f32[2,64], index: 2, kind: output, shape index: {}]
  %s3 = sld [smem:[#allocation0]]
  $region26: #{_lambda_.1} parent=0
    _
  %s5 = ssub.s32 1, %s3
  %s6 = scalar_select 0, %s5, %s3
  $region1: #{_lambda_.1} parent=0
    #allocation2 [shape = 'u8[524288]{0}', space=vmem, size = 0x80000, scoped, tag = 'input window, operand 0, single buffered']
    #allocation3 [shape = 's32[1]{0}', space=sflag, size = 0x4, scoped, tag = 'scoped memory for _lambda_.1']
    #allocation4 [shape = 's32[1]{0}', space=sflag, size = 0x4, scoped, tag = 'scoped memory for _lambda_.1']
    #allocation5 [shape = 'u8[262144]{0}', space=vmem, size = 0x40000, scoped, tag = 'input window, operand 1, single buffered']
    #allocation6 [shape = 's32[1]{0}', space=sflag, size = 0x4, scoped, tag = 'scoped memory for _lambda_.1']
    #allocation7 [shape = 'u8[1024]{0}', space=vmem, size = 0x400, scoped, tag = 'output window, operand 0, single buffered']
    %7 = vsyncpa [#allocation3], 0
    %8 = vsyncpa [#allocation6], 0
    %9 = vsyncpa [#allocation4], 0
    // Predicated region
    $region2: #{_lambda_.1} parent=1 // pred_check
      _
    $region3: #{_lambda_.1} parent=1 // pred_check_branch
      %11 = sbr.rel (0) target = $region5
    $region4: #{_lambda_.1} parent=1 // pred_region
      %13 = vsyncadd [#allocation3], 0
      %s14 = sshll.u32 %s0, 4
      %s15 = int_to_ptr.hbm [resolvable:$true] %s14
      %s16 = sshll.u32 [#allocation2], 4
      %s17 = int_to_ptr.vmem [resolvable:$true] %s16
      %22 = dma.hbm_to_vmem [thread:$0]  %s15, 16384, %s17, [#allocation3], 1024, 1024, 64
    $region5: #{_lambda_.1} parent=1 // pred_fallthru
      _
    // Predicated region
    $region6: #{_lambda_.1} parent=1 // pred_check
      _
    $region7: #{_lambda_.1} parent=1 // pred_check_branch
      %24 = sbr.rel (0) target = $region9
    $region8: #{_lambda_.1} parent=1 // pred_region
      %26 = vsyncadd [#allocation6], 0
      %s27 = sshll.u32 %s1, 4
      %s28 = int_to_ptr.hbm [resolvable:$true] %s27
      %s29 = sshll.u32 [#allocation5], 4
      %s30 = int_to_ptr.vmem [resolvable:$true] %s29
      %35 = dma.hbm_to_vmem [thread:$0]  %s28, 8192, %s30, [#allocation6], 1024, 1024, 64
    $region9: #{_lambda_.1} parent=1 // pred_fallthru
      _
    // Predicated region
    $region10: #{_lambda_.1} parent=1 // pred_check
      _
    $region11: #{_lambda_.1} parent=1 // pred_check_branch
      %37 = sbr.rel (0) target = $region13
    $region12: #{_lambda_.1} parent=1 // pred_region
      %39 = dma.done [#allocation3], 16384
    $region13: #{_lambda_.1} parent=1 // pred_fallthru
      _
    // Predicated region
    $region14: #{_lambda_.1} parent=1 // pred_check
      _
    $region15: #{_lambda_.1} parent=1 // pred_check_branch
      %41 = sbr.rel (0) target = $region17
    $region16: #{_lambda_.1} parent=1 // pred_region
      %43 = dma.done [#allocation6], 8192
    $region17: #{_lambda_.1} parent=1 // pred_fallthru
      _
    %v44 = vld [vmem:[#allocation2] sm:$0xff]
    %v45 = vld [vmem:[#allocation2 + $0x8] sm:$0xff]
    %v46 = vld [vmem:[#allocation2 + $0x10] sm:$0xff]
    %v47 = vld [vmem:[#allocation2 + $0x18] sm:$0xff]
    %v48 = vld [vmem:[#allocation2 + $0x20] sm:$0xff]
    %v49 = vld [vmem:[#allocation2 + $0x28] sm:$0xff]
    %v50 = vld [vmem:[#allocation2 + $0x30] sm:$0xff]
    %v51 = vld [vmem:[#allocation2 + $0x38] sm:$0xff]
    %v52 = vld [vmem:[#allocation2 + $0x40] sm:$0xff]
    %v53 = vld [vmem:[#allocation2 + $0x48] sm:$0xff]
    %v54 = vld [vmem:[#allocation2 + $0x50] sm:$0xff]
    %v55 = vld [vmem:[#allocation2 + $0x58] sm:$0xff]
    %v56 = vld [vmem:[#allocation2 + $0x60] sm:$0xff]
    %v57 = vld [vmem:[#allocation2 + $0x68] sm:$0xff]
    %v58 = vld [vmem:[#allocation2 + $0x70] sm:$0xff]
    %v59 = vld [vmem:[#allocation2 + $0x78] sm:$0xff]
    %v60 = vld [vmem:[#allocation2 + $0x80] sm:$0xff]
    %v61 = vld [vmem:[#allocation2 + $0x88] sm:$0xff]
    %v62 = vld [vmem:[#allocation2 + $0x90] sm:$0xff]
    %v63 = vld [vmem:[#allocation2 + $0x98] sm:$0xff]
    %v64 = vld [vmem:[#allocation2 + $0xa0] sm:$0xff]
    %v65 = vld [vmem:[#allocation2 + $0xa8] sm:$0xff]
    %v66 = vld [vmem:[#allocation2 + $0xb0] sm:$0xff]
    %v67 = vld [vmem:[#allocation2 + $0xb8] sm:$0xff]
    %v68 = vld [vmem:[#allocation2 + $0xc0] sm:$0xff]
    %v69 = vld [vmem:[#allocation2 + $0xc8] sm:$0xff]
    %v70 = vld [vmem:[#allocation2 + $0xd0] sm:$0xff]
    %v71 = vld [vmem:[#allocation2 + $0xd8] sm:$0xff]
    %v72 = vld [vmem:[#allocation2 + $0xe0] sm:$0xff]
    %v73 = vld [vmem:[#allocation2 + $0xe8] sm:$0xff]
    %v74 = vld [vmem:[#allocation2 + $0xf0] sm:$0xff]
    %v75 = vld [vmem:[#allocation2 + $0xf8] sm:$0xff]
    %v76 = vld [vmem:[#allocation2 + $0x100] sm:$0xff]
    %v77 = vld [vmem:[#allocation2 + $0x108] sm:$0xff]
    %v78 = vld [vmem:[#allocation2 + $0x110] sm:$0xff]
    %v79 = vld [vmem:[#allocation2 + $0x118] sm:$0xff]
    %v80 = vld [vmem:[#allocation2 + $0x120] sm:$0xff]
    %v81 = vld [vmem:[#allocation2 + $0x128] sm:$0xff]
    %v82 = vld [vmem:[#allocation2 + $0x130] sm:$0xff]
    %v83 = vld [vmem:[#allocation2 + $0x138] sm:$0xff]
    %v84 = vld [vmem:[#allocation2 + $0x140] sm:$0xff]
    %v85 = vld [vmem:[#allocation2 + $0x148] sm:$0xff]
    %v86 = vld [vmem:[#allocation2 + $0x150] sm:$0xff]
    %v87 = vld [vmem:[#allocation2 + $0x158] sm:$0xff]
    %v88 = vld [vmem:[#allocation2 + $0x160] sm:$0xff]
    %v89 = vld [vmem:[#allocation2 + $0x168] sm:$0xff]
    %v90 = vld [vmem:[#allocation2 + $0x170] sm:$0xff]
    %v91 = vld [vmem:[#allocation2 + $0x178] sm:$0xff]
    %v92 = vld [vmem:[#allocation2 + $0x180] sm:$0xff]
    %v93 = vld [vmem:[#allocation2 + $0x188] sm:$0xff]
    %v94 = vld [vmem:[#allocation2 + $0x190] sm:$0xff]
    %v95 = vld [vmem:[#allocation2 + $0x198] sm:$0xff]
    %v96 = vld [vmem:[#allocation2 + $0x1a0] sm:$0xff]
    %v97 = vld [vmem:[#allocation2 + $0x1a8] sm:$0xff]
    %v98 = vld [vmem:[#allocation2 + $0x1b0] sm:$0xff]
    %v99 = vld [vmem:[#allocation2 + $0x1b8] sm:$0xff]
    %v100 = vld [vmem:[#allocation2 + $0x1c0] sm:$0xff]
    %v101 = vld [vmem:[#allocation2 + $0x1c8] sm:$0xff]
    %v102 = vld [vmem:[#allocation2 + $0x1d0] sm:$0xff]
    %v103 = vld [vmem:[#allocation2 + $0x1d8] sm:$0xff]
    %v104 = vld [vmem:[#allocation2 + $0x1e0] sm:$0xff]
    %v105 = vld [vmem:[#allocation2 + $0x1e8] sm:$0xff]
    %v106 = vld [vmem:[#allocation2 + $0x1f0] sm:$0xff]
    %v107 = vld [vmem:[#allocation2 + $0x1f8] sm:$0xff]
    %v108 = vld [vmem:[#allocation2 + $0x200] sm:$0xff]
    %v109 = vld [vmem:[#allocation2 + $0x208] sm:$0xff]
    %v110 = vld [vmem:[#allocation2 + $0x210] sm:$0xff]
    %v111 = vld [vmem:[#allocation2 + $0x218] sm:$0xff]
    %v112 = vld [vmem:[#allocation2 + $0x220] sm:$0xff]
    %v113 = vld [vmem:[#allocation2 + $0x228] sm:$0xff]
    %v114 = vld [vmem:[#allocation2 + $0x230] sm:$0xff]
    %v115 = vld [vmem:[#allocation2 + $0x238] sm:$0xff]
    %v116 = vld [vmem:[#allocation2 + $0x240] sm:$0xff]
    %v117 = vld [vmem:[#allocation2 + $0x248] sm:$0xff]
    %v118 = vld [vmem:[#allocation2 + $0x250] sm:$0xff]
    %v119 = vld [vmem:[#allocation2 + $0x258] sm:$0xff]
    %v120 = vld [vmem:[#allocation2 + $0x260] sm:$0xff]
    %v121 = vld [vmem:[#allocation2 + $0x268] sm:$0xff]
    %v122 = vld [vmem:[#allocation2 + $0x270] sm:$0xff]
    %v123 = vld [vmem:[#allocation2 + $0x278] sm:$0xff]
    %v124 = vld [vmem:[#allocation2 + $0x280] sm:$0xff]
    %v125 = vld [vmem:[#allocation2 + $0x288] sm:$0xff]
    %v126 = vld [vmem:[#allocation2 + $0x290] sm:$0xff]
    %v127 = vld [vmem:[#allocation2 + $0x298] sm:$0xff]
    %v128 = vld [vmem:[#allocation2 + $0x2a0] sm:$0xff]
    %v129 = vld [vmem:[#allocation2 + $0x2a8] sm:$0xff]
    %v130 = vld [vmem:[#allocation2 + $0x2b0] sm:$0xff]
    %v131 = vld [vmem:[#allocation2 + $0x2b8] sm:$0xff]
    %v132 = vld [vmem:[#allocation2 + $0x2c0] sm:$0xff]
    %v133 = vld [vmem:[#allocation2 + $0x2c8] sm:$0xff]
    %v134 = vld [vmem:[#allocation2 + $0x2d0] sm:$0xff]
    %v135 = vld [vmem:[#allocation2 + $0x2d8] sm:$0xff]
    %v136 = vld [vmem:[#allocation2 + $0x2e0] sm:$0xff]
    %v137 = vld [vmem:[#allocation2 + $0x2e8] sm:$0xff]
    %v138 = vld [vmem:[#allocation2 + $0x2f0] sm:$0xff]
    %v139 = vld [vmem:[#allocation2 + $0x2f8] sm:$0xff]
    %v140 = vld [vmem:[#allocation2 + $0x300] sm:$0xff]
    %v141 = vld [vmem:[#allocation2 + $0x308] sm:$0xff]
    %v142 = vld [vmem:[#allocation2 + $0x310] sm:$0xff]
    %v143 = vld [vmem:[#allocation2 + $0x318] sm:$0xff]
    %v144 = vld [vmem:[#allocation2 + $0x320] sm:$0xff]
    %v145 = vld [vmem:[#allocation2 + $0x328] sm:$0xff]
    %v146 = vld [vmem:[#allocation2 + $0x330] sm:$0xff]
    %v147 = vld [vmem:[#allocation2 + $0x338] sm:$0xff]
    %v148 = vld [vmem:[#allocation2 + $0x340] sm:$0xff]
    %v149 = vld [vmem:[#allocation2 + $0x348] sm:$0xff]
    %v150 = vld [vmem:[#allocation2 + $0x350] sm:$0xff]
    %v151 = vld [vmem:[#allocation2 + $0x358] sm:$0xff]
    %v152 = vld [vmem:[#allocation2 + $0x360] sm:$0xff]
    %v153 = vld [vmem:[#allocation2 + $0x368] sm:$0xff]
    %v154 = vld [vmem:[#allocation2 + $0x370] sm:$0xff]
    %v155 = vld [vmem:[#allocation2 + $0x378] sm:$0xff]
    %v156 = vld [vmem:[#allocation2 + $0x380] sm:$0xff]
    %v157 = vld [vmem:[#allocation2 + $0x388] sm:$0xff]
    %v158 = vld [vmem:[#allocation2 + $0x390] sm:$0xff]
    %v159 = vld [vmem:[#allocation2 + $0x398] sm:$0xff]
    %v160 = vld [vmem:[#allocation2 + $0x3a0] sm:$0xff]
    %v161 = vld [vmem:[#allocation2 + $0x3a8] sm:$0xff]
    %v162 = vld [vmem:[#allocation2 + $0x3b0] sm:$0xff]
    %v163 = vld [vmem:[#allocation2 + $0x3b8] sm:$0xff]
    %v164 = vld [vmem:[#allocation2 + $0x3c0] sm:$0xff]
    %v165 = vld [vmem:[#allocation2 + $0x3c8] sm:$0xff]
    %v166 = vld [vmem:[#allocation2 + $0x3d0] sm:$0xff]
    %v167 = vld [vmem:[#allocation2 + $0x3d8] sm:$0xff]
    %v168 = vld [vmem:[#allocation2 + $0x3e0] sm:$0xff]
    %v169 = vld [vmem:[#allocation2 + $0x3e8] sm:$0xff]
    %v170 = vld [vmem:[#allocation2 + $0x3f0] sm:$0xff]
    %v171 = vld [vmem:[#allocation2 + $0x3f8] sm:$0xff]
    %v172 = vld [vmem:[#allocation5] sm:$0xff]
    %v173 = vld [vmem:[#allocation5 + $0x8] sm:$0xff]
    %v174 = vld [vmem:[#allocation5 + $0x10] sm:$0xff]
    %v175 = vld [vmem:[#allocation5 + $0x18] sm:$0xff]
    %v176 = vld [vmem:[#allocation5 + $0x20] sm:$0xff]
    %v177 = vld [vmem:[#allocation5 + $0x28] sm:$0xff]
    %v178 = vld [vmem:[#allocation5 + $0x30] sm:$0xff]
    %v179 = vld [vmem:[#allocation5 + $0x38] sm:$0xff]
    %v180 = vld [vmem:[#allocation5 + $0x40] sm:$0xff]
    %v181 = vld [vmem:[#allocation5 + $0x48] sm:$0xff]
    %v182 = vld [vmem:[#allocation5 + $0x50] sm:$0xff]
    %v183 = vld [vmem:[#allocation5 + $0x58] sm:$0xff]
    %v184 = vld [vmem:[#allocation5 + $0x60] sm:$0xff]
    %v185 = vld [vmem:[#allocation5 + $0x68] sm:$0xff]
    %v186 = vld [vmem:[#allocation5 + $0x70] sm:$0xff]
    %v187 = vld [vmem:[#allocation5 + $0x78] sm:$0xff]
    %v188 = vld [vmem:[#allocation5 + $0x80] sm:$0xff]
    %v189 = vld [vmem:[#allocation5 + $0x88] sm:$0xff]
    %v190 = vld [vmem:[#allocation5 + $0x90] sm:$0xff]
    %v191 = vld [vmem:[#allocation5 + $0x98] sm:$0xff]
    %v192 = vld [vmem:[#allocation5 + $0xa0] sm:$0xff]
    %v193 = vld [vmem:[#allocation5 + $0xa8] sm:$0xff]
    %v194 = vld [vmem:[#allocation5 + $0xb0] sm:$0xff]
    %v195 = vld [vmem:[#allocation5 + $0xb8] sm:$0xff]
    %v196 = vld [vmem:[#allocation5 + $0xc0] sm:$0xff]
    %v197 = vld [vmem:[#allocation5 + $0xc8] sm:$0xff]
    %v198 = vld [vmem:[#allocation5 + $0xd0] sm:$0xff]
    %v199 = vld [vmem:[#allocation5 + $0xd8] sm:$0xff]
    %v200 = vld [vmem:[#allocation5 + $0xe0] sm:$0xff]
    %v201 = vld [vmem:[#allocation5 + $0xe8] sm:$0xff]
    %v202 = vld [vmem:[#allocation5 + $0xf0] sm:$0xff]
    %v203 = vld [vmem:[#allocation5 + $0xf8] sm:$0xff]
    %v204 = vld [vmem:[#allocation5 + $0x100] sm:$0xff]
    %v205 = vld [vmem:[#allocation5 + $0x108] sm:$0xff]
    %v206 = vld [vmem:[#allocation5 + $0x110] sm:$0xff]
    %v207 = vld [vmem:[#allocation5 + $0x118] sm:$0xff]
    %v208 = vld [vmem:[#allocation5 + $0x120] sm:$0xff]
    %v209 = vld [vmem:[#allocation5 + $0x128] sm:$0xff]
    %v210 = vld [vmem:[#allocation5 + $0x130] sm:$0xff]
    %v211 = vld [vmem:[#allocation5 + $0x138] sm:$0xff]
    %v212 = vld [vmem:[#allocation5 + $0x140] sm:$0xff]
    %v213 = vld [vmem:[#allocation5 + $0x148] sm:$0xff]
    %v214 = vld [vmem:[#allocation5 + $0x150] sm:$0xff]
    %v215 = vld [vmem:[#allocation5 + $0x158] sm:$0xff]
    %v216 = vld [vmem:[#allocation5 + $0x160] sm:$0xff]
    %v217 = vld [vmem:[#allocation5 + $0x168] sm:$0xff]
    %v218 = vld [vmem:[#allocation5 + $0x170] sm:$0xff]
    %v219 = vld [vmem:[#allocation5 + $0x178] sm:$0xff]
    %v220 = vld [vmem:[#allocation5 + $0x180] sm:$0xff]
    %v221 = vld [vmem:[#allocation5 + $0x188] sm:$0xff]
    %v222 = vld [vmem:[#allocation5 + $0x190] sm:$0xff]
    %v223 = vld [vmem:[#allocation5 + $0x198] sm:$0xff]
    %v224 = vld [vmem:[#allocation5 + $0x1a0] sm:$0xff]
    %v225 = vld [vmem:[#allocation5 + $0x1a8] sm:$0xff]
    %v226 = vld [vmem:[#allocation5 + $0x1b0] sm:$0xff]
    %v227 = vld [vmem:[#allocation5 + $0x1b8] sm:$0xff]
    %v228 = vld [vmem:[#allocation5 + $0x1c0] sm:$0xff]
    %v229 = vld [vmem:[#allocation5 + $0x1c8] sm:$0xff]
    %v230 = vld [vmem:[#allocation5 + $0x1d0] sm:$0xff]
    %v231 = vld [vmem:[#allocation5 + $0x1d8] sm:$0xff]
    %v232 = vld [vmem:[#allocation5 + $0x1e0] sm:$0xff]
    %v233 = vld [vmem:[#allocation5 + $0x1e8] sm:$0xff]
    %v234 = vld [vmem:[#allocation5 + $0x1f0] sm:$0xff]
    %v235 = vld [vmem:[#allocation5 + $0x1f8] sm:$0xff]
    %v236 = vmul.f32 %v44, %v172
    %v237 = vmul.f32 %v45, %v173
    %v238 = vmul.f32 %v46, %v174
    %v239 = vmul.f32 %v47, %v175
    %v240 = vmul.f32 %v48, %v176
    %v241 = vmul.f32 %v49, %v177
    %v242 = vmul.f32 %v50, %v178
    %v243 = vmul.f32 %v51, %v179
    %v244 = vmul.f32 %v52, %v180
    %v245 = vmul.f32 %v53, %v181
    %v246 = vmul.f32 %v54, %v182
    %v247 = vmul.f32 %v55, %v183
    %v248 = vmul.f32 %v56, %v184
    %v249 = vmul.f32 %v57, %v185
    %v250 = vmul.f32 %v58, %v186
    %v251 = vmul.f32 %v59, %v187
    %v252 = vmul.f32 %v60, %v188
    %v253 = vmul.f32 %v61, %v189
    %v254 = vmul.f32 %v62, %v190
    %v255 = vmul.f32 %v63, %v191
    %v256 = vmul.f32 %v64, %v192
    %v257 = vmul.f32 %v65, %v193
    %v258 = vmul.f32 %v66, %v194
    %v259 = vmul.f32 %v67, %v195
    %v260 = vmul.f32 %v68, %v196
    %v261 = vmul.f32 %v69, %v197
    %v262 = vmul.f32 %v70, %v198
    %v263 = vmul.f32 %v71, %v199
    %v264 = vmul.f32 %v72, %v200
    %v265 = vmul.f32 %v73, %v201
    %v266 = vmul.f32 %v74, %v202
    %v267 = vmul.f32 %v75, %v203
    %v268 = vmul.f32 %v76, %v204
    %v269 = vmul.f32 %v77, %v205
    %v270 = vmul.f32 %v78, %v206
    %v271 = vmul.f32 %v79, %v207
    %v272 = vmul.f32 %v80, %v208
    %v273 = vmul.f32 %v81, %v209
    %v274 = vmul.f32 %v82, %v210
    %v275 = vmul.f32 %v83, %v211
    %v276 = vmul.f32 %v84, %v212
    %v277 = vmul.f32 %v85, %v213
    %v278 = vmul.f32 %v86, %v214
    %v279 = vmul.f32 %v87, %v215
    %v280 = vmul.f32 %v88, %v216
    %v281 = vmul.f32 %v89, %v217
    %v282 = vmul.f32 %v90, %v218
    %v283 = vmul.f32 %v91, %v219
    %v284 = vmul.f32 %v92, %v220
    %v285 = vmul.f32 %v93, %v221
    %v286 = vmul.f32 %v94, %v222
    %v287 = vmul.f32 %v95, %v223
    %v288 = vmul.f32 %v96, %v224
    %v289 = vmul.f32 %v97, %v225
    %v290 = vmul.f32 %v98, %v226
    %v291 = vmul.f32 %v99, %v227
    %v292 = vmul.f32 %v100, %v228
    %v293 = vmul.f32 %v101, %v229
    %v294 = vmul.f32 %v102, %v230
    %v295 = vmul.f32 %v103, %v231
    %v296 = vmul.f32 %v104, %v232
    %v297 = vmul.f32 %v105, %v233
    %v298 = vmul.f32 %v106, %v234
    %v299 = vmul.f32 %v107, %v235
    %v300 = vmul.f32 %v108, %v172
    %v301 = vmul.f32 %v109, %v173
    %v302 = vmul.f32 %v110, %v174
    %v303 = vmul.f32 %v111, %v175
    %v304 = vmul.f32 %v112, %v176
    %v305 = vmul.f32 %v113, %v177
    %v306 = vmul.f32 %v114, %v178
    %v307 = vmul.f32 %v115, %v179
    %v308 = vmul.f32 %v116, %v180
    %v309 = vmul.f32 %v117, %v181
    %v310 = vmul.f32 %v118, %v182
    %v311 = vmul.f32 %v119, %v183
    %v312 = vmul.f32 %v120, %v184
    %v313 = vmul.f32 %v121, %v185
    %v314 = vmul.f32 %v122, %v186
    %v315 = vmul.f32 %v123, %v187
    %v316 = vmul.f32 %v124, %v188
    %v317 = vmul.f32 %v125, %v189
    %v318 = vmul.f32 %v126, %v190
    %v319 = vmul.f32 %v127, %v191
    %v320 = vmul.f32 %v128, %v192
    %v321 = vmul.f32 %v129, %v193
    %v322 = vmul.f32 %v130, %v194
    %v323 = vmul.f32 %v131, %v195
    %v324 = vmul.f32 %v132, %v196
    %v325 = vmul.f32 %v133, %v197
    %v326 = vmul.f32 %v134, %v198
    %v327 = vmul.f32 %v135, %v199
    %v328 = vmul.f32 %v136, %v200
    %v329 = vmul.f32 %v137, %v201
    %v330 = vmul.f32 %v138, %v202
    %v331 = vmul.f32 %v139, %v203
    %v332 = vmul.f32 %v140, %v204
    %v333 = vmul.f32 %v141, %v205
    %v334 = vmul.f32 %v142, %v206
    %v335 = vmul.f32 %v143, %v207
    %v336 = vmul.f32 %v144, %v208
    %v337 = vmul.f32 %v145, %v209
    %v338 = vmul.f32 %v146, %v210
    %v339 = vmul.f32 %v147, %v211
    %v340 = vmul.f32 %v148, %v212
    %v341 = vmul.f32 %v149, %v213
    %v342 = vmul.f32 %v150, %v214
    %v343 = vmul.f32 %v151, %v215
    %v344 = vmul.f32 %v152, %v216
    %v345 = vmul.f32 %v153, %v217
    %v346 = vmul.f32 %v154, %v218
    %v347 = vmul.f32 %v155, %v219
    %v348 = vmul.f32 %v156, %v220
    %v349 = vmul.f32 %v157, %v221
    %v350 = vmul.f32 %v158, %v222
    %v351 = vmul.f32 %v159, %v223
    %v352 = vmul.f32 %v160, %v224
    %v353 = vmul.f32 %v161, %v225
    %v354 = vmul.f32 %v162, %v226
    %v355 = vmul.f32 %v163, %v227
    %v356 = vmul.f32 %v164, %v228
    %v357 = vmul.f32 %v165, %v229
    %v358 = vmul.f32 %v166, %v230
    %v359 = vmul.f32 %v167, %v231
    %v360 = vmul.f32 %v168, %v232
    %v361 = vmul.f32 %v169, %v233
    %v362 = vmul.f32 %v170, %v234
    %v363 = vmul.f32 %v171, %v235
    %v364 = vadd.f32 %v236, %v237
    %v365 = vadd.f32 %v364, %v238
    %v366 = vadd.f32 %v365, %v239
    %v367 = vadd.f32 %v366, %v240
    %v368 = vadd.f32 %v367, %v241
    %v369 = vadd.f32 %v368, %v242
    %vm370 = vcmask 850944
    %v371 = vsel %vm370, %v243, 0.0
    %v372 = vadd.f32 %v369, %v371
    %373 = vadd.xlane.f32.xlu0 %v372
    %v374 = vpop.xlane.xlu0 %373
    %v375 = vadd.f32 %v244, %v245
    %v376 = vadd.f32 %v375, %v246
    %v377 = vadd.f32 %v376, %v247
    %v378 = vadd.f32 %v377, %v248
    %v379 = vadd.f32 %v378, %v249
    %v380 = vadd.f32 %v379, %v250
    %v381 = vsel %vm370, %v251, 0.0
    %v382 = vadd.f32 %v380, %v381
    %383 = vadd.xlane.f32.xlu0 %v382
    %v384 = vpop.xlane.xlu0 %383
    %v385 = vadd.f32 %v252, %v253
    %v386 = vadd.f32 %v385, %v254
    %v387 = vadd.f32 %v386, %v255
    %v388 = vadd.f32 %v387, %v256
    %v389 = vadd.f32 %v388, %v257
    %v390 = vadd.f32 %v389, %v258
    %v391 = vsel %vm370, %v259, 0.0
    %v392 = vadd.f32 %v390, %v391
    %393 = vadd.xlane.f32.xlu0 %v392
    %v394 = vpop.xlane.xlu0 %393
    %v395 = vadd.f32 %v260, %v261
    %v396 = vadd.f32 %v395, %v262
    %v397 = vadd.f32 %v396, %v263
    %v398 = vadd.f32 %v397, %v264
    %v399 = vadd.f32 %v398, %v265
    %v400 = vadd.f32 %v399, %v266
    %v401 = vsel %vm370, %v267, 0.0
    %v402 = vadd.f32 %v400, %v401
    %403 = vadd.xlane.f32.xlu0 %v402
    %v404 = vpop.xlane.xlu0 %403
    %v405 = vadd.f32 %v268, %v269
    %v406 = vadd.f32 %v405, %v270
    %v407 = vadd.f32 %v406, %v271
    %v408 = vadd.f32 %v407, %v272
    %v409 = vadd.f32 %v408, %v273
    %v410 = vadd.f32 %v409, %v274
    %v411 = vsel %vm370, %v275, 0.0
    %v412 = vadd.f32 %v410, %v411
    %413 = vadd.xlane.f32.xlu0 %v412
    %v414 = vpop.xlane.xlu0 %413
    %v415 = vadd.f32 %v276, %v277
    %v416 = vadd.f32 %v415, %v278
    %v417 = vadd.f32 %v416, %v279
    %v418 = vadd.f32 %v417, %v280
    %v419 = vadd.f32 %v418, %v281
    %v420 = vadd.f32 %v419, %v282
    %v421 = vsel %vm370, %v283, 0.0
    %v422 = vadd.f32 %v420, %v421
    %423 = vadd.xlane.f32.xlu0 %v422
    %v424 = vpop.xlane.xlu0 %423
    %v425 = vadd.f32 %v284, %v285
    %v426 = vadd.f32 %v425, %v286
    %v427 = vadd.f32 %v426, %v287
    %v428 = vadd.f32 %v427, %v288
    %v429 = vadd.f32 %v428, %v289
    %v430 = vadd.f32 %v429, %v290
    %v431 = vsel %vm370, %v291, 0.0
    %v432 = vadd.f32 %v430, %v431
    %433 = vadd.xlane.f32.xlu0 %v432
    %v434 = vpop.xlane.xlu0 %433
    %v435 = vadd.f32 %v292, %v293
    %v436 = vadd.f32 %v435, %v294
    %v437 = vadd.f32 %v436, %v295
    %v438 = vadd.f32 %v437, %v296
    %v439 = vadd.f32 %v438, %v297
    %v440 = vadd.f32 %v439, %v298
    %v441 = vsel %vm370, %v299, 0.0
    %v442 = vadd.f32 %v440, %v441
    %443 = vadd.xlane.f32.xlu0 %v442
    %v444 = vpop.xlane.xlu0 %443
    %v445 = vadd.f32 %v300, %v301
    %v446 = vadd.f32 %v445, %v302
    %v447 = vadd.f32 %v446, %v303
    %v448 = vadd.f32 %v447, %v304
    %v449 = vadd.f32 %v448, %v305
    %v450 = vadd.f32 %v449, %v306
    %v451 = vsel %vm370, %v307, 0.0
    %v452 = vadd.f32 %v450, %v451
    %453 = vadd.xlane.f32.xlu0 %v452
    %v454 = vpop.xlane.xlu0 %453
    %v455 = vadd.f32 %v308, %v309
    %v456 = vadd.f32 %v455, %v310
    %v457 = vadd.f32 %v456, %v311
    %v458 = vadd.f32 %v457, %v312
    %v459 = vadd.f32 %v458, %v313
    %v460 = vadd.f32 %v459, %v314
    %v461 = vsel %vm370, %v315, 0.0
    %v462 = vadd.f32 %v460, %v461
    %463 = vadd.xlane.f32.xlu0 %v462
    %v464 = vpop.xlane.xlu0 %463
    %v465 = vadd.f32 %v316, %v317
    %v466 = vadd.f32 %v465, %v318
    %v467 = vadd.f32 %v466, %v319
    %v468 = vadd.f32 %v467, %v320
    %v469 = vadd.f32 %v468, %v321
    %v470 = vadd.f32 %v469, %v322
    %v471 = vsel %vm370, %v323, 0.0
    %v472 = vadd.f32 %v470, %v471
    %473 = vadd.xlane.f32.xlu0 %v472
    %v474 = vpop.xlane.xlu0 %473
    %v475 = vadd.f32 %v324, %v325
    %v476 = vadd.f32 %v475, %v326
    %v477 = vadd.f32 %v476, %v327
    %v478 = vadd.f32 %v477, %v328
    %v479 = vadd.f32 %v478, %v329
    %v480 = vadd.f32 %v479, %v330
    %v481 = vsel %vm370, %v331, 0.0
    %v482 = vadd.f32 %v480, %v481
    %483 = vadd.xlane.f32.xlu0 %v482
    %v484 = vpop.xlane.xlu0 %483
    %v485 = vadd.f32 %v332, %v333
    %v486 = vadd.f32 %v485, %v334
    %v487 = vadd.f32 %v486, %v335
    %v488 = vadd.f32 %v487, %v336
    %v489 = vadd.f32 %v488, %v337
    %v490 = vadd.f32 %v489, %v338
    %v491 = vsel %vm370, %v339, 0.0
    %v492 = vadd.f32 %v490, %v491
    %493 = vadd.xlane.f32.xlu0 %v492
    %v494 = vpop.xlane.xlu0 %493
    %v495 = vadd.f32 %v340, %v341
    %v496 = vadd.f32 %v495, %v342
    %v497 = vadd.f32 %v496, %v343
    %v498 = vadd.f32 %v497, %v344
    %v499 = vadd.f32 %v498, %v345
    %v500 = vadd.f32 %v499, %v346
    %v501 = vsel %vm370, %v347, 0.0
    %v502 = vadd.f32 %v500, %v501
    %503 = vadd.xlane.f32.xlu0 %v502
    %v504 = vpop.xlane.xlu0 %503
    %v505 = vadd.f32 %v348, %v349
    %v506 = vadd.f32 %v505, %v350
    %v507 = vadd.f32 %v506, %v351
    %v508 = vadd.f32 %v507, %v352
    %v509 = vadd.f32 %v508, %v353
    %v510 = vadd.f32 %v509, %v354
    %v511 = vsel %vm370, %v355, 0.0
    %v512 = vadd.f32 %v510, %v511
    %513 = vadd.xlane.f32.xlu0 %v512
    %v514 = vpop.xlane.xlu0 %513
    %v515 = vadd.f32 %v356, %v357
    %v516 = vadd.f32 %v515, %v358
    %v517 = vadd.f32 %v516, %v359
    %v518 = vadd.f32 %v517, %v360
    %v519 = vadd.f32 %v518, %v361
    %v520 = vadd.f32 %v519, %v362
    %v521 = vsel %vm370, %v363, 0.0
    %v522 = vadd.f32 %v520, %v521
    %523 = vadd.xlane.f32.xlu0 %v522
    %v524 = vpop.xlane.xlu0 %523
    %v541 = vlaneseq
    %v542 = vand.u32 %v541, 127
    %v543 = vperm.slane %v374, %v542
    %v544 = vadd.s32 %v542, 4294967288
    %v545 = vperm.slane %v384, %v544
    %vm546 = vcmask 130112
    %v547 = vsel %vm546, %v545, %v543
    %v548 = vadd.s32 %v542, 4294967280
    %v549 = vperm.slane %v394, %v548
    %vm550 = vcmask 195712
    %v551 = vsel %vm550, %v549, %v547
    %v552 = vadd.s32 %v542, 4294967272
    %v553 = vperm.slane %v404, %v552
    %vm554 = vcmask 261312
    %v555 = vsel %vm554, %v553, %v551
    %v556 = vadd.s32 %v542, 4294967264
    %v557 = vperm.slane %v414, %v556
    %vm558 = vcmask 326912
    %v559 = vsel %vm558, %v557, %v555
    %v560 = vadd.s32 %v542, 4294967256
    %v561 = vperm.slane %v424, %v560
    %vm562 = vcmask 392512
    %v563 = vsel %vm562, %v561, %v559
    %v564 = vadd.s32 %v542, 4294967248
    %v565 = vperm.slane %v434, %v564
    %vm566 = vcmask 458112
    %v567 = vsel %vm566, %v565, %v563
    %v568 = vadd.s32 %v542, 4294967240
    %v569 = vperm.slane %v444, %v568
    %vm570 = vcmask 523712
    %v571 = vsel %vm570, %v569, %v567
    %v572 = vperm.slane %v454, %v542
    %v573 = vperm.slane %v464, %v544
    %v574 = vsel %vm546, %v573, %v572
    %v575 = vperm.slane %v474, %v548
    %v576 = vsel %vm550, %v575, %v574
    %v577 = vperm.slane %v484, %v552
    %v578 = vsel %vm554, %v577, %v576
    %v579 = vperm.slane %v494, %v556
    %v580 = vsel %vm558, %v579, %v578
    %v581 = vperm.slane %v504, %v560
    %v582 = vsel %vm562, %v581, %v580
    %v583 = vperm.slane %v514, %v564
    %v584 = vsel %vm566, %v583, %v582
    %v585 = vperm.slane %v524, %v568
    %v586 = vsel %vm570, %v585, %v584
    %vm587 = vcmask 1041409
    %v588 = vsel %vm587, %v586, %v571
    %vm590 = vcmask 517120
    %591 = vst.msk [vmem:[#allocation7] sm:$0x3] %vm590, %v588
    // Predicated region
    $region18: #{_lambda_.1} parent=1 // pred_check
      _
    $region19: #{_lambda_.1} parent=1 // pred_check_branch
      %593 = sbr.rel (0) target = $region21
    $region20: #{_lambda_.1} parent=1 // pred_region
      %595 = vsyncadd [#allocation4], 0
      %s597 = sshll.u32 [#allocation7], 4
      %s598 = int_to_ptr.vmem [resolvable:$true] %s597
      %s599 = sshll.u32 %s2, 4
      %s600 = int_to_ptr.hbm [resolvable:$true] %s599
      %602 = dma.vmem_to_hbm [thread:$0]  %s598, 32, %s600, [#allocation4]
    $region21: #{_lambda_.1} parent=1 // pred_fallthru
      _
    // Predicated region
    $region22: #{_lambda_.1} parent=1 // pred_check
      _
    $region23: #{_lambda_.1} parent=1 // pred_check_branch
      %604 = sbr.rel (0) target = $region25
    $region24: #{_lambda_.1} parent=1 // pred_region
      %606 = dma.done [#allocation4], 32
    $region25: #{_lambda_.1} parent=1 // pred_fallthru
      _
    %607 = vsyncpa [#allocation3], 1
    %608 = vsyncpa [#allocation6], 1
    %609 = vsyncpa [#allocation4], 1

</llo_original>
